<compile_context>
chip_gen: v7x
topology: tpu7x:2x2x1
jax: 0.10.0
libtpu: 0.0.40
codegen_flags: <defaults>
</compile_context>

<pallas_src>
import jax
import jax.numpy as jnp
from jax.experimental import pallas as pl
from jax.experimental.pallas import tpu as pltpu

_EPSILON = 1e-6
_MAX_TILE_LANES = 32768           # hard cap on the spatial tile width (lanes)
_MAX_PRED_BLOCK_BYTES = 4 << 20   # keep a single logits block <= 4 MiB
                                  # (x2 double-buffering stays far below the
                                  #  16/32 MiB scoped-VMEM defaults on v5e/v6e/v7x)


def _dice_kernel(pred_ref, true_ref, dice_ref, inter_acc, denom_acc):
    # pred_ref : (1, C, T)  logits block in native dtype (f32 / bf16)
    # true_ref : (1, 1, T)  int32 labels, -1 marks padded lanes
    # dice_ref : (1, C, 1)  per-(batch, class) soft dice, written on last tile
    # inter_acc, denom_acc : (C, 1) f32 VMEM accumulators (persist across s)
    s = pl.program_id(1)
    num_s = pl.num_programs(1)

    @pl.when(s == 0)
    def _init():
        inter_acc[...] = jnp.zeros_like(inter_acc)
        denom_acc[...] = jnp.zeros_like(denom_acc)

    logits = pred_ref[0].astype(jnp.float32)          # (C, T) -- cast in-kernel
    labels = true_ref[0]                              # (1, T) int32
    C, T = logits.shape

    # Per-pixel softmax over the class (sublane) axis.
    m = jnp.max(logits, axis=0, keepdims=True)        # (1, T)
    e = jnp.exp(logits - m)                           # (C, T)
    se = jnp.sum(e, axis=0, keepdims=True)            # (1, T)
    r = pl.reciprocal(se, approx=True)                # EUP slot, nearly free
    r = r * (2.0 - se * r)                            # one Newton step -> ~exact
    p = e * r                                         # (C, T) softmax probs

    # One-hot(labels) and validity mask (padded lanes carry label == -1, so
    # onehot is already zero there; the mask keeps p^2 off the denominator).
    class_ids = jax.lax.broadcasted_iota(jnp.int32, (C, T), 0)
    onehot = (labels == class_ids).astype(jnp.float32)     # (C, T)
    valid = (labels >= 0).astype(jnp.float32)               # (1, T)

    inter_acc[...] += jnp.sum(p * onehot, axis=1, keepdims=True)
    # onehot^2 == onehot for {0,1} values.
    denom_acc[...] += jnp.sum(p * p * valid + onehot, axis=1, keepdims=True)

    @pl.when(s == num_s - 1)
    def _finalize():
        dice_ref[0] = ((2.0 * inter_acc[...] + _EPSILON)
                       / (denom_acc[...] + _EPSILON))


def _pick_spatial_tile(s_pad, num_classes, pred_itemsize):
    """Pick a lane-multiple spatial tile; prefer one that divides s_pad exactly."""
    budget = _MAX_PRED_BLOCK_BYTES // max(1, pred_itemsize * num_classes)
    max_lanes = max(512, min(_MAX_TILE_LANES, budget))
    max_lanes = (max_lanes // 128) * 128

    n128 = s_pad // 128
    tile = 128
    for d in range(min(n128, max_lanes // 128), 0, -1):
        if n128 % d == 0:
            tile = d * 128
            break
    if tile < 512 and s_pad > tile:
        # Awkward spatial size: accept a little padding to keep tiles big.
        tile = min(max_lanes, s_pad)
        s_pad = pl.cdiv(s_pad, tile) * tile
    return tile, s_pad


def dice_loss(y_pred, y_true):
    """y_pred: [B, C, *spatial] logits (any float dtype);
       y_true: [B, *spatial] (or [B, 1, *spatial]) integer class labels."""
    B, C = y_pred.shape[0], y_pred.shape[1]
    yp = y_pred.reshape(B, C, -1)                     # [B, C, S], native dtype
    S = yp.shape[-1]
    yt = y_true.reshape(B, 1, -1)                     # [B, 1, S]
    if yt.dtype != jnp.int32:
        yt = yt.astype(jnp.int32)

    s_pad = pl.cdiv(S, 128) * 128
    tile, s_pad = _pick_spatial_tile(s_pad, C, jnp.dtype(yp.dtype).itemsize)
    if s_pad != S:
        # Padded lanes get label -1 and are masked out inside the kernel.
        yp = jnp.pad(yp, ((0, 0), (0, 0), (0, s_pad - S)))
        yt = jnp.pad(yt, ((0, 0), (0, 0), (0, s_pad - S)), constant_values=-1)

    num_s = s_pad // tile

    dice = pl.pallas_call(
        _dice_kernel,
        out_shape=jax.ShapeDtypeStruct((B, C, 1), jnp.float32),
        grid_spec=pltpu.PrefetchScalarGridSpec(
            num_scalar_prefetch=0,
            grid=(B, num_s),
            in_specs=[
                pl.BlockSpec((1, C, tile), lambda b, s: (b, 0, s)),
                pl.BlockSpec((1, 1, tile), lambda b, s: (b, 0, s)),
            ],
            out_specs=pl.BlockSpec((1, C, 1), lambda b, s: (b, 0, 0)),
            scratch_shapes=[
                pltpu.VMEM((C, 1), jnp.float32),   # intersection accumulator
                pltpu.VMEM((C, 1), jnp.float32),   # denominator accumulator
            ],
        ),
        compiler_params=pltpu.CompilerParams(
            dimension_semantics=("parallel", "arbitrary")),
    )(yp, yt)

    return 1.0 - jnp.mean(dice)


def _dice_loss_ref(y_pred, y_true):
    """Pure-JAX reference mirroring the PyTorch module, for verification."""
    B, C = y_pred.shape[0], y_pred.shape[1]
    yp = y_pred.reshape(B, C, -1).astype(jnp.float32)
    yt = y_true.reshape(B, -1).astype(jnp.int32)
    p = jax.nn.softmax(yp, axis=1)
    oh = jnp.transpose(jax.nn.one_hot(yt, C, dtype=jnp.float32), (0, 2, 1))
    inter = jnp.sum(p * oh, axis=2)
    denom = jnp.sum(p * p + oh * oh, axis=2)
    dice = (2.0 * inter + _EPSILON) / (denom + _EPSILON)
    return 1.0 - jnp.mean(dice)


if __name__ == "__main__":
    key = jax.random.PRNGKey(0)
    k1, k2 = jax.random.split(key)

    B, C, H, W = 2, 4, 16, 16
    y_pred = jax.random.normal(k1, (B, C, H, W), dtype=jnp.float32)
    y_true = jax.random.randint(k2, (B, H, W), 0, C, dtype=jnp.int32)

    loss = jax.block_until_ready(dice_loss(y_pred, y_true))
    loss_ref = jax.block_until_ready(_dice_loss_ref(y_pred, y_true))

    assert jnp.allclose(loss, loss_ref, atol=1e-5, rtol=1e-5), (loss, loss_ref)
    print("KERNEL_OK")
</pallas_src>

<mosaic_0001>
module attributes {stable_mosaic.version = 11 : i64} {
  func.func @_dice_kernel(%arg0: i32, %arg1: i32, %arg2: memref<1x4x256xf32, #tpu.memory_space<vmem>>, %arg3: memref<1x1x256xi32, #tpu.memory_space<vmem>>, %arg4: memref<1x4x1xf32, #tpu.memory_space<vmem>>, %arg5: memref<4x1xf32, #tpu.memory_space<vmem>>, %arg6: memref<4x1xf32, #tpu.memory_space<vmem>>) attributes {dimension_semantics = [#tpu.dimension_semantics<parallel>, #tpu.dimension_semantics<arbitrary>], iteration_bounds = array<i64: 2, 1>, scalar_prefetch = 0 : i64, scratch_operands = 2 : i64, tpu.core_type = #tpu.core_type<tc>, window_params = [{transform_indices = @transform_0, window_bounds = array<i64: 1, 4, 256>}, {transform_indices = @transform_1, window_bounds = array<i64: 1, 1, 256>}, {transform_indices = @transform_2, window_bounds = array<i64: 1, 4, 1>}]} {
    %c0_i32 = arith.constant 0 : i32
    %0 = arith.cmpi eq, %arg1, %c0_i32 : i32
    %1 = arith.extui %0 : i1 to i32
    %c0_i32_0 = arith.constant 0 : i32
    %2 = arith.cmpi ne, %1, %c0_i32_0 : i32
    scf.if %2 {
      %cst_21 = arith.constant 0.000000e+00 : f32
      %48 = vector.broadcast %cst_21 : f32 to vector<4x1xf32>
      %c0_22 = arith.constant 0 : index
      %c0_23 = arith.constant 0 : index
      %49 = vector.load %arg5[%c0_22, %c0_23] : memref<4x1xf32, #tpu.memory_space<vmem>>, vector<4x1xf32>
      tpu.vector_store %arg5[%c0_22, %c0_23], %48 {strides = array<i32>} : memref<4x1xf32, #tpu.memory_space<vmem>>, vector<4x1xf32>,
      %cst_24 = arith.constant 0.000000e+00 : f32
      %50 = vector.broadcast %cst_24 : f32 to vector<4x1xf32>
      %c0_25 = arith.constant 0 : index
      %c0_26 = arith.constant 0 : index
      %51 = vector.load %arg6[%c0_25, %c0_26] : memref<4x1xf32, #tpu.memory_space<vmem>>, vector<4x1xf32>
      tpu.vector_store %arg6[%c0_25, %c0_26], %50 {strides = array<i32>} : memref<4x1xf32, #tpu.memory_space<vmem>>, vector<4x1xf32>,
    } else {
    }
    %c0 = arith.constant 0 : index
    %c0_1 = arith.constant 0 : index
    %c0_2 = arith.constant 0 : index
    %3 = vector.load %arg2[%c0, %c0_1, %c0_2] : memref<1x4x256xf32, #tpu.memory_space<vmem>>, vector<1x4x256xf32>
    %4 = vector.shape_cast %3 : vector<1x4x256xf32> to vector<4x256xf32>
    %c0_3 = arith.constant 0 : index
    %c0_4 = arith.constant 0 : index
    %c0_5 = arith.constant 0 : index
    %5 = vector.load %arg3[%c0_3, %c0_4, %c0_5] : memref<1x1x256xi32, #tpu.memory_space<vmem>>, vector<1x1x256xi32>
    %6 = vector.shape_cast %5 : vector<1x1x256xi32> to vector<1x256xi32>
    %cst = arith.constant dense<0xFF800000> : vector<256xf32>
    %7 = vector.multi_reduction <maximumf>, %4, %cst [0] : vector<4x256xf32> to vector<256xf32>
    %8 = vector.shape_cast %7 : vector<256xf32> to vector<1x256xf32>
    %9 = vector.broadcast %8 : vector<1x256xf32> to vector<4x256xf32>
    %10 = arith.subf %4, %9 : vector<4x256xf32>
    %11 = math.exp %10 : vector<4x256xf32>
    %cst_6 = arith.constant dense<0.000000e+00> : vector<256xf32>
    %12 = vector.multi_reduction <add>, %11, %cst_6 [0] : vector<4x256xf32> to vector<256xf32>
    %13 = vector.shape_cast %12 : vector<256xf32> to vector<1x256xf32>
    %14 = tpu.reciprocal %13 {approx = true} : vector<1x256xf32> -> vector<1x256xf32>
    %15 = arith.mulf %13, %14 : vector<1x256xf32>
    %cst_7 = arith.constant 2.000000e+00 : f32
    %16 = vector.broadcast %cst_7 : f32 to vector<1x256xf32>
    %17 = arith.subf %16, %15 : vector<1x256xf32>
    %18 = arith.mulf %14, %17 : vector<1x256xf32>
    %19 = vector.broadcast %18 : vector<1x256xf32> to vector<4x256xf32>
    %20 = arith.mulf %11, %19 : vector<4x256xf32>
    %21 = tpu.iota {dimensions = array<i32: 0>} : vector<4x256xi32>
    %22 = vector.broadcast %6 : vector<1x256xi32> to vector<4x256xi32>
    %23 = arith.cmpi eq, %22, %21 : vector<4x256xi32>
    %24 = arith.extui %23 : vector<4x256xi1> to vector<4x256xi32>
    %25 = arith.sitofp %24 : vector<4x256xi32> to vector<4x256xf32>
    %c0_i32_8 = arith.constant 0 : i32
    %26 = vector.broadcast %c0_i32_8 : i32 to vector<1x256xi32>
    %27 = arith.cmpi sge, %6, %26 : vector<1x256xi32>
    %28 = arith.extui %27 : vector<1x256xi1> to vector<1x256xi32>
    %29 = arith.sitofp %28 : vector<1x256xi32> to vector<1x256xf32>
    %c0_9 = arith.constant 0 : index
    %c0_10 = arith.constant 0 : index
    %30 = vector.load %arg5[%c0_9, %c0_10] : memref<4x1xf32, #tpu.memory_space<vmem>>, vector<4x1xf32>
    %31 = arith.mulf %20, %25 : vector<4x256xf32>
    %cst_11 = arith.constant dense<0.000000e+00> : vector<4xf32>
    %32 = vector.multi_reduction <add>, %31, %cst_11 [1] : vector<4x256xf32> to vector<4xf32>
    %33 = vector.shape_cast %32 : vector<4xf32> to vector<4x1xf32>
    %34 = arith.addf %30, %33 : vector<4x1xf32>
    %c0_12 = arith.constant 0 : index
    %c0_13 = arith.constant 0 : index
    %35 = vector.load %arg5[%c0_12, %c0_13] : memref<4x1xf32, #tpu.memory_space<vmem>>, vector<4x1xf32>
    tpu.vector_store %arg5[%c0_12, %c0_13], %34 {strides = array<i32>} : memref<4x1xf32, #tpu.memory_space<vmem>>, vector<4x1xf32>,
    %c0_14 = arith.constant 0 : index
    %c0_15 = arith.constant 0 : index
    %36 = vector.load %arg6[%c0_14, %c0_15] : memref<4x1xf32, #tpu.memory_space<vmem>>, vector<4x1xf32>
    %37 = arith.mulf %20, %20 : vector<4x256xf32>
    %38 = vector.broadcast %29 : vector<1x256xf32> to vector<4x256xf32>
    %39 = arith.mulf %37, %38 : vector<4x256xf32>
    %40 = arith.addf %39, %25 : vector<4x256xf32>
    %cst_16 = arith.constant dense<0.000000e+00> : vector<4xf32>
    %41 = vector.multi_reduction <add>, %40, %cst_16 [1] : vector<4x256xf32> to vector<4xf32>
    %42 = vector.shape_cast %41 : vector<4xf32> to vector<4x1xf32>
    %43 = arith.addf %36, %42 : vector<4x1xf32>
    %c0_17 = arith.constant 0 : index
    %c0_18 = arith.constant 0 : index
    %44 = vector.load %arg6[%c0_17, %c0_18] : memref<4x1xf32, #tpu.memory_space<vmem>>, vector<4x1xf32>
    tpu.vector_store %arg6[%c0_17, %c0_18], %43 {strides = array<i32>} : memref<4x1xf32, #tpu.memory_space<vmem>>, vector<4x1xf32>,
    %c0_i32_19 = arith.constant 0 : i32
    %45 = arith.cmpi eq, %arg1, %c0_i32_19 : i32
    %46 = arith.extui %45 : i1 to i32
    %c0_i32_20 = arith.constant 0 : i32
    %47 = arith.cmpi ne, %46, %c0_i32_20 : i32
    scf.if %47 {
      %c0_21 = arith.constant 0 : index
      %c0_22 = arith.constant 0 : index
      %48 = vector.load %arg5[%c0_21, %c0_22] : memref<4x1xf32, #tpu.memory_space<vmem>>, vector<4x1xf32>
      %cst_23 = arith.constant 2.000000e+00 : f32
      %49 = vector.broadcast %cst_23 : f32 to vector<4x1xf32>
      %50 = arith.mulf %49, %48 : vector<4x1xf32>
      %cst_24 = arith.constant 9.99999997E-7 : f32
      %51 = vector.broadcast %cst_24 : f32 to vector<4x1xf32>
      %52 = arith.addf %50, %51 : vector<4x1xf32>
      %c0_25 = arith.constant 0 : index
      %c0_26 = arith.constant 0 : index
      %53 = vector.load %arg6[%c0_25, %c0_26] : memref<4x1xf32, #tpu.memory_space<vmem>>, vector<4x1xf32>
      %cst_27 = arith.constant 9.99999997E-7 : f32
      %54 = vector.broadcast %cst_27 : f32 to vector<4x1xf32>
      %55 = arith.addf %53, %54 : vector<4x1xf32>
      %56 = arith.divf %52, %55 : vector<4x1xf32>
      %c0_28 = arith.constant 0 : index
      %c0_29 = arith.constant 0 : index
      %c0_30 = arith.constant 0 : index
      %57 = vector.load %arg4[%c0_28, %c0_29, %c0_30] : memref<1x4x1xf32, #tpu.memory_space<vmem>>, vector<1x4x1xf32>
      %58 = vector.shape_cast %57 : vector<1x4x1xf32> to vector<4x1xf32>
      %59 = vector.shape_cast %56 : vector<4x1xf32> to vector<1x4x1xf32>
      tpu.vector_store %arg4[%c0_28, %c0_29, %c0_30], %59 {strides = array<i32>} : memref<1x4x1xf32, #tpu.memory_space<vmem>>, vector<1x4x1xf32>,
    } else {
    }
    return
  }
  func.func @transform_0(%arg0: i32, %arg1: i32) -> (i32, i32, i32) {
    %c0_i32 = arith.constant 0 : i32
    %c0_i32_0 = arith.constant 0 : i32
    return %arg0, %c0_i32, %arg1 : i32, i32, i32
  }
  func.func @transform_1(%arg0: i32, %arg1: i32) -> (i32, i32, i32) {
    %c0_i32 = arith.constant 0 : i32
    %c0_i32_0 = arith.constant 0 : i32
    return %arg0, %c0_i32, %arg1 : i32, i32, i32
  }
  func.func @transform_2(%arg0: i32, %arg1: i32) -> (i32, i32, i32) {
    %c0_i32 = arith.constant 0 : i32
    %c0_i32_0 = arith.constant 0 : i32
    %c0_i32_1 = arith.constant 0 : i32
    return %arg0, %c0_i32, %c0_i32_0 : i32, i32, i32
  }
}

</mosaic_0001>

<llo_original>
// kernel: tpu_custom_call.1
$region0: #{tpu_custom_call.1}
  #allocation0 [shape = 'u32[]', space=smem, size = 0x4, offset = 0x4, fixed_abs, tag = 'smem constant byte address 0x4 - core index']
  #allocation1 [shape = 'u32[144,128]{1,0:T(1,128)}', space=vmem, size = 0x12000, scoped, tag = 'internal scratch']
  #allocation2 [shape = 'f32[4,1]{1,0:T(4,128)}', space=vmem, size = 0x800, scoped, tag = 'scratch operand']
  #allocation3 [shape = 'f32[4,1]{1,0:T(4,128)}', space=vmem, size = 0x800, scoped, tag = 'scratch operand']
  %s0 = inlined_call_operand.hbm [shape: f32[2,4,256], index: 0, kind: input, shape index: {}]
  %s1 = inlined_call_operand.hbm [shape: s32[2,1,256], index: 1, kind: input, shape index: {}]
  %s2 = inlined_call_operand.vmem [shape: f32[2,4,1], index: 2, kind: output, shape index: {}]
  %s3 = sld [smem:[#allocation0]]
  $region57: #{tpu_custom_call.1} parent=0
    _
  %s5 = ssub.s32 1, %s3
  %s6 = scalar_select 0, %s5, %s3
  $region1: #{tpu_custom_call.1} parent=0
    #allocation4 [shape = 'u8[8192]{0}', space=vmem, size = 0x2000, scoped, tag = 'input window, operand 0']
    #allocation5 [shape = 's32[2]{0}', space=sflag, size = 0x8, scoped, tag = 'scoped memory for tpu_custom_call.1']
    #allocation6 [shape = 'u8[2048]{0}', space=vmem, size = 0x800, scoped, tag = 'input window, operand 1']
    #allocation7 [shape = 's32[2]{0}', space=sflag, size = 0x8, scoped, tag = 'scoped memory for tpu_custom_call.1']
    %7 = vsyncpa [#allocation5], 0
    %s8 = scalar_lea.sflag [#allocation5], 1
    %9 = vsyncpa %s8, 0
    %10 = vsyncpa [#allocation7], 0
    %s11 = scalar_lea.sflag [#allocation7], 1
    %12 = vsyncpa %s11, 0
    loop: start=0, step=1, limit=4
    $region2: #{tpu_custom_call.1} parent=1 // loop_pre_header
      _
    $region3: #{tpu_custom_call.1} parent=1 // loop_header
      %s14 = sphi 0, %s18
      %p15 = scmp.ge.s32.totalorder %s14, 4
      %s21 = sphi 0, %s33
      %s22 = sphi 0, %s29
      %s23 = sphi 0, %s21
      %s24 = sphi 0, %s22
      %s25 = sphi 0, %s23
      %s26 = sphi 0, %s24
      %s38 = sphi 0, %s40
      %s41 = sphi 0, %s38
      %s42 = sphi 0, %s41
      %s58 = sphi 0, %s42
      %s66 = sphi 0, %s68
      %s69 = sphi 0, %s66
      %s70 = sphi 0, %s69
      %s86 = sphi 0, %s70
      %s92 = sphi 0, %s94
      %s95 = sphi 0, %s92
      %s96 = sphi 0, %s95
      %s112 = sphi 0, %s96
    $region4: #{tpu_custom_call.1} parent=1 // loop_header_branch
      %17 = sbr.rel (%p15) target = $region8
    $region5: #{tpu_custom_call.1} parent=1 // loop_body
      %s19 = ssub.s32 %s14, 1
      %s20 = ssub.s32 %s14, 2
      %s27 = sadd.s32 1, %s22
      %p28 = scmp.ge.s32.totalorder %s27, 1
      %s29 = scalar_select %p28, 0, %s27
      %s30 = sadd.s32 1, %s21
      %s31 = scalar_select %p28, %s30, %s21
      %p32 = scmp.ge.s32.totalorder %s31, 2
      %s33 = scalar_select %p32, 0, %s31
      %s34 = ssub.s32 %s21, %s33
      %s35 = ssub.s32 %s22, %s29
      %s36 = sor.u32 %s34, %s35
      %p37 = scmp.eq.s32.totalorder %s36, 0
      %s39 = sadd.s32 %s38, 1
      %s40 = scalar_select %p37, %s38, %s39
      %p43 = pneg %p37
      %p44 = scmp.eq.s32.totalorder %s14, 1
      %p45 = por %p43, %p44
      %p46 = scmp.ne.s32.totalorder %s38, %s41
      %p47 = scmp.eq.s32.totalorder %s14, 0
      %p48 = por %p46, %p47
      %p49 = scmp.ne.s32.totalorder %s38, %s41
      %p50 = scmp.eq.s32.totalorder %s19, 1
      %p51 = por %p49, %p50
      %p52 = scmp.ne.s32.totalorder %s41, %s42
      %p53 = scmp.eq.s32.totalorder %s19, 0
      %p54 = por %p52, %p53
      %p55 = scmp.ne.s32.totalorder %s41, %s42
      %p56 = scmp.eq.s32.totalorder %s20, 1
      %p57 = por %p55, %p56
      %p59 = scmp.ne.s32.totalorder %s42, %s58
      %p60 = scmp.eq.s32.totalorder %s20, 0
      %p61 = por %p59, %p60
      %s62 = ssub.s32 %s21, %s33
      %s63 = ssub.s32 %s22, %s29
      %s64 = sor.u32 %s62, %s63
      %p65 = scmp.eq.s32.totalorder %s64, 0
      %s67 = sadd.s32 %s66, 1
      %s68 = scalar_select %p65, %s66, %s67
      %p71 = pneg %p65
      %p72 = scmp.eq.s32.totalorder %s14, 1
      %p73 = por %p71, %p72
      %p74 = scmp.ne.s32.totalorder %s66, %s69
      %p75 = scmp.eq.s32.totalorder %s14, 0
      %p76 = por %p74, %p75
      %p77 = scmp.ne.s32.totalorder %s66, %s69
      %p78 = scmp.eq.s32.totalorder %s19, 1
      %p79 = por %p77, %p78
      %p80 = scmp.ne.s32.totalorder %s69, %s70
      %p81 = scmp.eq.s32.totalorder %s19, 0
      %p82 = por %p80, %p81
      %p83 = scmp.ne.s32.totalorder %s69, %s70
      %p84 = scmp.eq.s32.totalorder %s20, 1
      %p85 = por %p83, %p84
      %p87 = scmp.ne.s32.totalorder %s70, %s86
      %p88 = scmp.eq.s32.totalorder %s20, 0
      %p89 = por %p87, %p88
      %s90 = ssub.s32 %s21, %s33
      %p91 = scmp.eq.s32.totalorder %s90, 0
      %s93 = sadd.s32 %s92, 1
      %s94 = scalar_select %p91, %s92, %s93
      %p97 = pneg %p91
      %p98 = scmp.eq.s32.totalorder %s14, 1
      %p99 = por %p97, %p98
      %p100 = scmp.ne.s32.totalorder %s92, %s95
      %p101 = scmp.eq.s32.totalorder %s14, 0
      %p102 = por %p100, %p101
      %p103 = scmp.ne.s32.totalorder %s92, %s95
      %p104 = scmp.eq.s32.totalorder %s19, 1
      %p105 = por %p103, %p104
      %p106 = scmp.ne.s32.totalorder %s95, %s96
      %p107 = scmp.eq.s32.totalorder %s19, 0
      %p108 = por %p106, %p107
      %p109 = scmp.ne.s32.totalorder %s95, %s96
      %p110 = scmp.eq.s32.totalorder %s20, 1
      %p111 = por %p109, %p110
      %p113 = scmp.ne.s32.totalorder %s96, %s112
      %p114 = scmp.eq.s32.totalorder %s20, 0
      %p115 = por %p113, %p114
      %p116 = scmp.le.s32.totalorder 1, %s14
      %p117 = scmp.lt.s32.totalorder %s14, 3
      %p118 = pnand %p116, %p117
      %p119 = pneg %p118
      // Predicated region
      $region9: #{tpu_custom_call.1} parent=5 // pred_check
        _
      $region10: #{tpu_custom_call.1} parent=5 // pred_check_branch
        %121 = sbr.rel (%p118) target = $region12
      $region11: #{tpu_custom_call.1} parent=5 // pred_region
        %s122 = ssub.s32 %s14, 1
      $region12: #{tpu_custom_call.1} parent=5 // pred_fallthru
        _
      %p123 = scmp.lt.s32.totalorder %s14, 2
      // Predicated region
      $region13: #{tpu_custom_call.1} parent=5 // pred_check
        %p124 = pneg %p123
      $region14: #{tpu_custom_call.1} parent=5 // pred_check_branch
        %126 = sbr.rel (%p124) target = $region16
      $region15: #{tpu_custom_call.1} parent=5 // pred_region
        // Predicated region
        $region17: #{tpu_custom_call.1} parent=15 // pred_check
          %p127 = pneg %p48
        $region18: #{tpu_custom_call.1} parent=15 // pred_check_branch
          %129 = sbr.rel (%p127) target = $region20
        $region19: #{tpu_custom_call.1} parent=15 // pred_region
          %s130 = sand.u32 %s38, 1
          %s131 = scalar_lea.sflag [#allocation5], %s130
          %s132 = sand.u32 %s38, 1
          %s133 = smul.addr %s132, 8
          %s134 = scalar_lea.vmem [#allocation4], %s133
          %s135 = smul.u32 2, %s22
          %s137 = ssub.s32 128, 128
          %138 = vsyncadd %s131, %s137
          %s139 = smul.addr %s21, 2
          %s140 = sadd.s32 %s135, %s139
          %s141 = smul.addr %s140, 64
          %s142 = scalar_lea.hbm %s0, %s141
          %s144 = sshll.u32 %s134, 4
          %s145 = int_to_ptr.vmem [resolvable:$true] %s144
          %147 = dma.hbm_to_vmem [thread:$0]  %s142, 128, %s145, %s131
        $region20: #{tpu_custom_call.1} parent=15 // pred_fallthru
          _
        // Predicated region
        $region21: #{tpu_custom_call.1} parent=15 // pred_check
          %p148 = pneg %p76
        $region22: #{tpu_custom_call.1} parent=15 // pred_check_branch
          %150 = sbr.rel (%p148) target = $region24
        $region23: #{tpu_custom_call.1} parent=15 // pred_region
          %s151 = sand.u32 %s66, 1
          %s152 = scalar_lea.sflag [#allocation7], %s151
          %s153 = sand.u32 %s66, 1
          %s154 = smul.addr %s153, 2
          %s155 = scalar_lea.vmem [#allocation6], %s154
          %s156 = smul.u32 2, %s22
          %s158 = ssub.s32 32, 32
          %159 = vsyncadd %s152, %s158
          %s160 = smul.addr %s21, 2
          %s161 = sadd.s32 %s156, %s160
          %s162 = smul.addr %s161, 16
          %s163 = scalar_lea.hbm %s1, %s162
          %s165 = sshll.u32 %s155, 4
          %s166 = int_to_ptr.vmem [resolvable:$true] %s165
          %168 = dma.hbm_to_vmem [thread:$0]  %s163, 32, %s166, %s152
        $region24: #{tpu_custom_call.1} parent=15 // pred_fallthru
          _
      $region16: #{tpu_custom_call.1} parent=5 // pred_fallthru
        _
      %p169 = scmp.le.s32.totalorder 1, %s14
      %p170 = scmp.lt.s32.totalorder %s14, 3
      %p171 = pnand %p169, %p170
      %p172 = pneg %p171
      // Predicated region
      $region25: #{tpu_custom_call.1} parent=5 // pred_check
        _
      $region26: #{tpu_custom_call.1} parent=5 // pred_check_branch
        %174 = sbr.rel (%p171) target = $region28
      $region27: #{tpu_custom_call.1} parent=5 // pred_region
        %s175 = ssub.s32 %s14, 1
        %s176 = sand.u32 %s41, 1
        %s177 = scalar_lea.sflag [#allocation5], %s176
        %s178 = sand.u32 %s41, 1
        %s179 = smul.addr %s178, 8
        %s180 = scalar_lea.vmem [#allocation4], %s179
        // Predicated region
        $region29: #{tpu_custom_call.1} parent=27 // pred_check
          %p181 = pneg %p54
        $region30: #{tpu_custom_call.1} parent=27 // pred_check_branch
          %183 = sbr.rel (%p181) target = $region32
        $region31: #{tpu_custom_call.1} parent=27 // pred_region
          %184 = dma.done %s177, 128
        $region32: #{tpu_custom_call.1} parent=27 // pred_fallthru
          _
        %s185 = sand.u32 %s69, 1
        %s186 = scalar_lea.sflag [#allocation7], %s185
        %s187 = sand.u32 %s69, 1
        %s188 = smul.addr %s187, 2
        %s189 = scalar_lea.vmem [#allocation6], %s188
        // Predicated region
        $region33: #{tpu_custom_call.1} parent=27 // pred_check
          %p190 = pneg %p82
        $region34: #{tpu_custom_call.1} parent=27 // pred_check_branch
          %192 = sbr.rel (%p190) target = $region36
        $region35: #{tpu_custom_call.1} parent=27 // pred_region
          %193 = dma.done %s186, 32
        $region36: #{tpu_custom_call.1} parent=27 // pred_fallthru
          _
        %s194 = sand.u32 %s41, 1
        %s195 = scalar_lea.sflag [#allocation5], %s194
        %s196 = sand.u32 %s41, 1
        %s197 = smul.addr %s196, 8
        %s198 = scalar_lea.vmem [#allocation4], %s197
        %p199 = pneg %p54
        %p200 = pneg %p51
        %s201 = sand.u32 %s69, 1
        %s202 = scalar_lea.sflag [#allocation7], %s201
        %s203 = sand.u32 %s69, 1
        %s204 = smul.addr %s203, 2
        %s205 = scalar_lea.vmem [#allocation6], %s204
        %p206 = pneg %p82
        %p207 = pneg %p79
        %p208 = pneg %p108
        %p209 = pneg %p105
        %p210 = scmp.lt.s32.totalorder %s23, 1
        %s211 = scalar_select %p210, %s23, 1
        %s212 = smul.addr %s211, 4
        %s213 = scalar_lea.vmem %s2, %s212
        %s214 = smul.u32 2, %s24
        %s215 = smul.u32 2, %s24
        %p216 = scmp.lt.s32.totalorder %s23, 1
        %s217 = scalar_select %p216, %s23, 1
        %s218 = smul.addr %s217, 4
        %s219 = scalar_lea.vmem %s2, %s218
        %p220 = scmp.eq.s32.totalorder %s24, 0
        // Predicated region
        $region37: #{tpu_custom_call.1} parent=27 // pred_check
          %p221 = pneg %p220
        $region38: #{tpu_custom_call.1} parent=27 // pred_check_branch
          %223 = sbr.rel (%p221) target = $region40
        $region39: #{tpu_custom_call.1} parent=27 // pred_region
          %vm224 = vcmask 3072
          %225 = vst.msk [vmem:[#allocation2] sm:$0xf] %vm224, 0.0
          %226 = vst.msk [vmem:[#allocation3] sm:$0xf] %vm224, 0.0
        $region40: #{tpu_custom_call.1} parent=27 // pred_fallthru
          _
        %v227 = vld [vmem:[%s180] sm:$0xff]
        %v228 = vld [vmem:[%s189] sm:$0x3]
        %v230 = vcombine.high %v227, %v227
        %vm232 = vcmask 1043456
        %v233 = vsel %vm232, %v227, -inf
        %v234 = vrot.slane %v233, 4
        %v235 = vmax.f32 %v233, %v234
        %v236 = vrot.slane %v235, 2
        %v237 = vmax.f32 %v235, %v236
        %v238 = vrot.slane %v237, 1
        %v239 = vmax.f32 %v237, %v238
        %v240 = vsel %vm232, %v230, -inf
        %v241 = vrot.slane %v240, 4
        %v242 = vmax.f32 %v240, %v241
        %v243 = vrot.slane %v242, 2
        %v244 = vmax.f32 %v242, %v243
        %v245 = vrot.slane %v244, 1
        %v246 = vmax.f32 %v244, %v245
        %v249 = vcombine.low %v239, %v246
        %v251 = vsub.f32 %v227, %v249
        %v252 = vmul.f32 %v251, 1.442695
        %v253 = vpow.pop %v252
        %v255 = vcombine.high %v253, %v253
        %v257 = vsel %vm232, %v253, 0.0
        %v258 = vrot.slane %v257, 4
        %v259 = vadd.f32 %v257, %v258
        %v260 = vrot.slane %v259, 2
        %v261 = vadd.f32 %v259, %v260
        %v262 = vrot.slane %v261, 1
        %v263 = vadd.f32 %v261, %v262
        %v264 = vsel %vm232, %v255, 0.0
        %v265 = vrot.slane %v264, 4
        %v266 = vadd.f32 %v264, %v265
        %v267 = vrot.slane %v266, 2
        %v268 = vadd.f32 %v266, %v267
        %v269 = vrot.slane %v268, 1
        %v270 = vadd.f32 %v268, %v269
        %v271 = vrcp.pop %v263
        %v272 = vrcp.pop %v270
        %v273 = vmul.f32 %v263, %v271
        %v274 = vmul.f32 %v270, %v272
        %v275 = vsub.f32 2.0, %v273
        %v276 = vsub.f32 2.0, %v274
        %v277 = vmul.f32 %v271, %v275
        %v278 = vmul.f32 %v272, %v276
        %v281 = vcombine.low %v277, %v278
        %v283 = vmul.f32 %v253, %v281
        %v284 = vlaneseq
        %v285 = vshrl.u32 %v284, 7
        %v286 = vlaneseq
        %v287 = vshrl.u32 %v286, 7
        %v288 = vsub.s32 0, %v287
        %v289 = vrot.slane %v228, %v288
        %v290 = vlaneseq
        %v291 = vshrl.u32 %v290, 7
        %v292 = vsub.s32 1, %v291
        %v293 = vrot.slane %v228, %v292
        %vm294 = vcmp.eq.s32.totalorder %v289, %v285
        %vm295 = vcmp.eq.s32.totalorder %v293, %v285
        %v296 = vsel %vm294, 1, 0
        %v297 = vsel %vm295, 1, 0
        %v298 = vcvt.s32.f32 %v296
        %v299 = vcvt.s32.f32 %v297
        %vm300 = vcmp.ge.s32.totalorder %v228, 0
        %v301 = vsel %vm300, 1, 0
        %v302 = vcvt.s32.f32 %v301
        %v303 = vld [vmem:[#allocation2] sm:$0xf]
        %v306 = vcombine.low %v298, %v299
        %v308 = vmul.f32 %v283, %v306
        %v310 = vcombine.high %v308, %v308
        %v312 = vsel %vm232, %v308, 0.0
        %v313 = vsel %vm232, %v310, 0.0
        %v314 = vadd.f32 %v312, %v313
        %315 = vadd.xlane.f32.xlu0 %v314
        %v316 = vpop.xlane.xlu0 %315
        %v317 = vadd.f32 %v303, %v316
        %vm318 = vcmask 3072
        %319 = vst.msk [vmem:[#allocation2] sm:$0xf] %vm318, %v317
        %v320 = vld [vmem:[#allocation3] sm:$0xf]
        %v321 = vmul.f32 %v283, %v283
        %v323 = vlaneseq
        %v324 = vshrl.u32 %v323, 7
        %v325 = vsub.s32 0, %v324
        %v326 = vrot.slane %v302, %v325
        %v327 = vlaneseq
        %v328 = vshrl.u32 %v327, 7
        %v329 = vsub.s32 1, %v328
        %v330 = vrot.slane %v302, %v329
        %v331 = vcombine.low %v326, %v330
        %v333 = vmul.f32 %v321, %v331
        %v334 = vadd.f32 %v333, %v306
        %v336 = vcombine.high %v334, %v334
        %v338 = vsel %vm232, %v334, 0.0
        %v339 = vsel %vm232, %v336, 0.0
        %v340 = vadd.f32 %v338, %v339
        %341 = vadd.xlane.f32.xlu0 %v340
        %v342 = vpop.xlane.xlu0 %341
        %v343 = vadd.f32 %v320, %v342
        %344 = vst.msk [vmem:[#allocation3] sm:$0xf] %vm318, %v343
        // Predicated region
        $region41: #{tpu_custom_call.1} parent=27 // pred_check
          %p345 = pneg %p220
        $region42: #{tpu_custom_call.1} parent=27 // pred_check_branch
          %347 = sbr.rel (%p345) target = $region44
        $region43: #{tpu_custom_call.1} parent=27 // pred_region
          %v348 = vld [vmem:[#allocation2] sm:$0xf]
          %v349 = vmul.f32 %v348, 2.0
          %v350 = vadd.f32 %v349, 1e-06
          %v351 = vld [vmem:[#allocation3] sm:$0xf]
          %v352 = vadd.f32 %v351, 1e-06
          %v353 = vrcp.pop %v352
          %v354 = vmul.f32 %v350, %v353
          %355 = vst.msk [vmem:[%s219] sm:$0xf] %vm318, %v354
        $region44: #{tpu_custom_call.1} parent=27 // pred_fallthru
          _
        %p356 = scmp.lt.s32.totalorder %s23, 1
        %s357 = scalar_select %p356, %s23, 1
        %s358 = smul.addr %s357, 4
        %s359 = scalar_lea.vmem %s2, %s358
        // Predicated region
        $region45: #{tpu_custom_call.1} parent=27 // pred_check
          %p360 = pneg %p105
        $region46: #{tpu_custom_call.1} parent=27 // pred_check_branch
          %362 = sbr.rel (%p360) target = $region48
        $region47: #{tpu_custom_call.1} parent=27 // pred_region
          _
        $region48: #{tpu_custom_call.1} parent=27 // pred_fallthru
          _
      $region28: #{tpu_custom_call.1} parent=5 // pred_fallthru
        _
      %p363 = scmp.le.s32.totalorder 2, %s14
      // Predicated region
      $region49: #{tpu_custom_call.1} parent=5 // pred_check
        %p364 = pneg %p363
      $region50: #{tpu_custom_call.1} parent=5 // pred_check_branch
        %366 = sbr.rel (%p364) target = $region52
      $region51: #{tpu_custom_call.1} parent=5 // pred_region
        %s367 = ssub.s32 %s14, 2
        // Predicated region
        $region53: #{tpu_custom_call.1} parent=51 // pred_check
          %p368 = pneg %p111
        $region54: #{tpu_custom_call.1} parent=51 // pred_check_branch
          %370 = sbr.rel (%p368) target = $region56
        $region55: #{tpu_custom_call.1} parent=51 // pred_region
          %p371 = scmp.lt.s32.totalorder %s25, 1
          %s372 = scalar_select %p371, %s25, 1
          %s373 = smul.addr %s372, 4
          %s374 = scalar_lea.vmem %s2, %s373
        $region56: #{tpu_custom_call.1} parent=51 // pred_fallthru
          _
      $region52: #{tpu_custom_call.1} parent=5 // pred_fallthru
        _
    $region6: #{tpu_custom_call.1} parent=1 // loop_footer
      %s18 = sadd.s32 1, %s14
    $region7: #{tpu_custom_call.1} parent=1 // loop_footer_branch
      %13 = sbr.rel target = $region3
    $region8: #{tpu_custom_call.1} parent=1 // loop_exit
      _
    %375 = vsyncpa [#allocation5], 1
    %s376 = scalar_lea.sflag [#allocation5], 1
    %377 = vsyncpa %s376, 1
    %378 = vsyncpa [#allocation7], 1
    %s379 = scalar_lea.sflag [#allocation7], 1
    %380 = vsyncpa %s379, 1

</llo_original>
